<compile_context>
chip_gen: v5e
topology: v5e:2x2
jax: 0.10.0
libtpu: 0.0.40
codegen_flags: <defaults>
</compile_context>

<pallas_src>
import functools

import jax
import jax.numpy as jnp
from jax.experimental import pallas as pl
from jax.experimental.pallas import tpu as pltpu

LANE = 128          # lane-dense output width
MAX_TB = 512        # batch rows per grid step (sized for v7x 64 MiB VMEM)


def _round_up(n, m):
    return ((n + m - 1) // m) * m


def mlp_kernel(x_ref, w1_ref, b1_ref, w2_ref, b2_ref, w3_ref, o_ref, *, in_features):
    x = x_ref[...]                      # (TB, in_features)
    w1 = w1_ref[...]                    # (in_features, H1)

    # fc1 + ReLU as VPU broadcast-FMAs (contraction depth is tiny; keep the MXU free).
    # Bias is added once (no re-broadcast per term).
    h1 = x[:, 0:1] * w1[0:1, :] + b1_ref[...]
    for k in range(1, in_features):
        h1 = h1 + x[:, k:k + 1] * w1[k:k + 1, :]
    h1 = jnp.maximum(h1, 0.0)

    # fc2 + ReLU on the MXU, f32 accumulation.
    h2 = jnp.dot(h1, w2_ref[...], preferred_element_type=jnp.float32) + b2_ref[...]
    h2 = jnp.maximum(h2, 0.0)

    # out (no bias): lane-dense (TB, 128) store; w3 was zero-padded to 128 cols.
    o_ref[...] = jnp.dot(h2, w3_ref[...],
                         preferred_element_type=jnp.float32).astype(o_ref.dtype)


def deterministic_model_forward(x, w1, b1, w2, b2, w3, *, tb=MAX_TB):
    """x: (B, in_features) f32 -> (B, num_actions) f32."""
    batch, in_features = x.shape
    h1 = w1.shape[1]
    h2 = w2.shape[1]
    num_actions = w3.shape[1]

    # Zero-pad w3 columns to a lane-dense width so the output block is (TB, 128).
    # Padded lanes stay exactly zero and are sliced off before returning.
    w3p = jnp.zeros((h2, LANE), w3.dtype).at[:, :num_actions].set(w3)

    # Pick a batch tile (multiple of 8 sublanes) and pad the batch to a multiple of it.
    tb = max(8, min(tb, _round_up(batch, 8)))
    b_pad = _round_up(batch, tb)
    if b_pad != batch:
        x = jnp.pad(x, ((0, b_pad - batch), (0, 0)))
    grid = (b_pad // tb,)

    flops = 2 * b_pad * (in_features * h1 + h1 * h2 + h2 * LANE)
    bytes_accessed = (x.size + w1.size + b1.size + w2.size + b2.size + w3p.size
                      + b_pad * LANE) * 4

    out = pl.pallas_call(
        functools.partial(mlp_kernel, in_features=in_features),
        out_shape=jax.ShapeDtypeStruct((b_pad, LANE), jnp.float32),
        grid=grid,
        in_specs=[
            pl.BlockSpec((tb, in_features), lambda i: (i, 0)),   # x: streamed per tile
            pl.BlockSpec((in_features, h1), lambda i: (0, 0)),   # w1: VMEM-resident
            pl.BlockSpec((1, h1),           lambda i: (0, 0)),   # b1
            pl.BlockSpec((h1, h2),          lambda i: (0, 0)),   # w2
            pl.BlockSpec((1, h2),           lambda i: (0, 0)),   # b2
            pl.BlockSpec((h2, LANE),        lambda i: (0, 0)),   # w3 (lane-padded)
        ],
        out_specs=pl.BlockSpec((tb, LANE), lambda i: (i, 0)),
        compiler_params=pltpu.CompilerParams(
            dimension_semantics=("parallel",),
            vmem_limit_bytes=32 * 1024 * 1024,
        ),
        cost_estimate=pl.CostEstimate(
            flops=flops, transcendentals=0, bytes_accessed=bytes_accessed),
    )(x, w1, b1, w2, b2, w3p)

    return out[:batch, :num_actions]


def init_params(in_features=4, num_actions=18, h1=64, h2=64):
    """Deterministic init mimicking PyTorch nn.Linear (uniform +-1/sqrt(fan_in)),
    with the final layer weight scaled by 0.1 as in the module's __init__."""
    key = jax.random.PRNGKey(0)
    k1, k2, k3, k4, k5 = jax.random.split(key, 5)

    def u(k, shape, fan_in):
        bound = 1.0 / jnp.sqrt(jnp.float32(fan_in))
        return jax.random.uniform(k, shape, jnp.float32, -bound, bound)

    # stored as (in_dim, out_dim) == transpose of PyTorch's (out, in)
    w1 = u(k1, (in_features, h1), in_features)
    b1 = u(k2, (1, h1), in_features)
    w2 = u(k3, (h1, h2), h1)
    b2 = u(k4, (1, h2), h1)
    w3 = u(k5, (h2, num_actions), h2) * 0.1   # self.out.weight.data.mul_(0.1)
    return w1, b1, w2, b2, w3


def reference_forward(x, w1, b1, w2, b2, w3):
    h1 = jnp.maximum(x @ w1 + b1, 0.0)
    h2 = jnp.maximum(h1 @ w2 + b2, 0.0)
    return h2 @ w3


if __name__ == "__main__":
    in_features, num_actions = 4, 18
    batch = 8

    params = init_params(in_features=in_features, num_actions=num_actions)
    x = jax.random.normal(jax.random.PRNGKey(1), (batch, in_features), jnp.float32)

    out = deterministic_model_forward(x, *params)
    out = jax.block_until_ready(out)

    ref = reference_forward(x, *params)
    assert out.shape == (batch, num_actions)
    assert jnp.allclose(out, ref, atol=1e-5, rtol=1e-5)

    print("KERNEL_OK")
</pallas_src>

<mosaic_0001>
module attributes {stable_mosaic.version = 11 : i64} {
  func.func @mlp_kernel(%arg0: i32, %arg1: memref<8x4xf32, #tpu.memory_space<vmem>>, %arg2: memref<4x64xf32, #tpu.memory_space<vmem>>, %arg3: memref<1x64xf32, #tpu.memory_space<vmem>>, %arg4: memref<64x64xf32, #tpu.memory_space<vmem>>, %arg5: memref<1x64xf32, #tpu.memory_space<vmem>>, %arg6: memref<64x128xf32, #tpu.memory_space<vmem>>, %arg7: memref<8x128xf32, #tpu.memory_space<vmem>>) attributes {dimension_semantics = [#tpu.dimension_semantics<parallel>], iteration_bounds = array<i64: 1>, scalar_prefetch = 0 : i64, scratch_operands = 0 : i64, tpu.core_type = #tpu.core_type<tc>, window_params = [{transform_indices = @transform_0, window_bounds = array<i64: 8, 4>}, {pipeline_mode = #tpu.pipeline_mode<synchronous>, transform_indices = @transform_1, window_bounds = array<i64: 4, 64>}, {pipeline_mode = #tpu.pipeline_mode<synchronous>, transform_indices = @transform_2, window_bounds = array<i64: 1, 64>}, {pipeline_mode = #tpu.pipeline_mode<synchronous>, transform_indices = @transform_3, window_bounds = array<i64: 64, 64>}, {pipeline_mode = #tpu.pipeline_mode<synchronous>, transform_indices = @transform_4, window_bounds = array<i64: 1, 64>}, {pipeline_mode = #tpu.pipeline_mode<synchronous>, transform_indices = @transform_5, window_bounds = array<i64: 64, 128>}, {transform_indices = @transform_6, window_bounds = array<i64: 8, 128>}]} {
    %c0 = arith.constant 0 : index
    %c0_0 = arith.constant 0 : index
    %0 = vector.load %arg1[%c0, %c0_0] : memref<8x4xf32, #tpu.memory_space<vmem>>, vector<8x4xf32>
    %c0_1 = arith.constant 0 : index
    %c0_2 = arith.constant 0 : index
    %1 = vector.load %arg2[%c0_1, %c0_2] : memref<4x64xf32, #tpu.memory_space<vmem>>, vector<4x64xf32>
    %2 = vector.extract_strided_slice %0 {offsets = [0, 0], sizes = [8, 1], strides = [1, 1]} : vector<8x4xf32> to vector<8x1xf32>
    %3 = vector.extract_strided_slice %1 {offsets = [0, 0], sizes = [1, 64], strides = [1, 1]} : vector<4x64xf32> to vector<1x64xf32>
    %4 = vector.broadcast %2 : vector<8x1xf32> to vector<8x64xf32>
    %5 = vector.broadcast %3 : vector<1x64xf32> to vector<8x64xf32>
    %6 = arith.mulf %4, %5 : vector<8x64xf32>
    %c0_3 = arith.constant 0 : index
    %c0_4 = arith.constant 0 : index
    %7 = vector.load %arg3[%c0_3, %c0_4] : memref<1x64xf32, #tpu.memory_space<vmem>>, vector<1x64xf32>
    %8 = vector.broadcast %7 : vector<1x64xf32> to vector<8x64xf32>
    %9 = arith.addf %6, %8 : vector<8x64xf32>
    %10 = vector.extract_strided_slice %0 {offsets = [0, 1], sizes = [8, 1], strides = [1, 1]} : vector<8x4xf32> to vector<8x1xf32>
    %11 = vector.extract_strided_slice %1 {offsets = [1, 0], sizes = [1, 64], strides = [1, 1]} : vector<4x64xf32> to vector<1x64xf32>
    %12 = vector.broadcast %10 : vector<8x1xf32> to vector<8x64xf32>
    %13 = vector.broadcast %11 : vector<1x64xf32> to vector<8x64xf32>
    %14 = arith.mulf %12, %13 : vector<8x64xf32>
    %15 = arith.addf %9, %14 : vector<8x64xf32>
    %16 = vector.extract_strided_slice %0 {offsets = [0, 2], sizes = [8, 1], strides = [1, 1]} : vector<8x4xf32> to vector<8x1xf32>
    %17 = vector.extract_strided_slice %1 {offsets = [2, 0], sizes = [1, 64], strides = [1, 1]} : vector<4x64xf32> to vector<1x64xf32>
    %18 = vector.broadcast %16 : vector<8x1xf32> to vector<8x64xf32>
    %19 = vector.broadcast %17 : vector<1x64xf32> to vector<8x64xf32>
    %20 = arith.mulf %18, %19 : vector<8x64xf32>
    %21 = arith.addf %15, %20 : vector<8x64xf32>
    %22 = vector.extract_strided_slice %0 {offsets = [0, 3], sizes = [8, 1], strides = [1, 1]} : vector<8x4xf32> to vector<8x1xf32>
    %23 = vector.extract_strided_slice %1 {offsets = [3, 0], sizes = [1, 64], strides = [1, 1]} : vector<4x64xf32> to vector<1x64xf32>
    %24 = vector.broadcast %22 : vector<8x1xf32> to vector<8x64xf32>
    %25 = vector.broadcast %23 : vector<1x64xf32> to vector<8x64xf32>
    %26 = arith.mulf %24, %25 : vector<8x64xf32>
    %27 = arith.addf %21, %26 : vector<8x64xf32>
    %cst = arith.constant 0.000000e+00 : f32
    %28 = vector.broadcast %cst : f32 to vector<8x64xf32>
    %29 = arith.maximumf %27, %28 : vector<8x64xf32>
    %c0_5 = arith.constant 0 : index
    %c0_6 = arith.constant 0 : index
    %30 = vector.load %arg4[%c0_5, %c0_6] : memref<64x64xf32, #tpu.memory_space<vmem>>, vector<64x64xf32>
    %cst_7 = arith.constant dense<0.000000e+00> : vector<8x64xf32>
    %31 = tpu.matmul %29, %30, %cst_7 {dimension_numbers = #tpu.dot_dimension_numbers<[1], [0], [0], [1], [0, 0, 1, 1], [], []>} : vector<8x64xf32>, vector<64x64xf32>, vector<8x64xf32> -> vector<8x64xf32>
    %c0_8 = arith.constant 0 : index
    %c0_9 = arith.constant 0 : index
    %32 = vector.load %arg5[%c0_8, %c0_9] : memref<1x64xf32, #tpu.memory_space<vmem>>, vector<1x64xf32>
    %33 = vector.broadcast %32 : vector<1x64xf32> to vector<8x64xf32>
    %34 = arith.addf %31, %33 : vector<8x64xf32>
    %cst_10 = arith.constant 0.000000e+00 : f32
    %35 = vector.broadcast %cst_10 : f32 to vector<8x64xf32>
    %36 = arith.maximumf %34, %35 : vector<8x64xf32>
    %c0_11 = arith.constant 0 : index
    %c0_12 = arith.constant 0 : index
    %37 = vector.load %arg6[%c0_11, %c0_12] : memref<64x128xf32, #tpu.memory_space<vmem>>, vector<64x128xf32>
    %cst_13 = arith.constant dense<0.000000e+00> : vector<8x128xf32>
    %38 = tpu.matmul %36, %37, %cst_13 {dimension_numbers = #tpu.dot_dimension_numbers<[1], [0], [0], [1], [0, 0, 1, 1], [], []>} : vector<8x64xf32>, vector<64x128xf32>, vector<8x128xf32> -> vector<8x128xf32>
    %c0_14 = arith.constant 0 : index
    %c0_15 = arith.constant 0 : index
    %39 = vector.load %arg7[%c0_14, %c0_15] : memref<8x128xf32, #tpu.memory_space<vmem>>, vector<8x128xf32>
    tpu.vector_store %arg7[%c0_14, %c0_15], %38 {strides = array<i32>} : memref<8x128xf32, #tpu.memory_space<vmem>>, vector<8x128xf32>,
    return
  }
  func.func @transform_0(%arg0: i32) -> (i32, i32) {
    %c0_i32 = arith.constant 0 : i32
    %c0_i32_0 = arith.constant 0 : i32
    return %arg0, %c0_i32 : i32, i32
  }
  func.func @transform_1(%arg0: i32) -> (i32, i32) {
    %c0_i32 = arith.constant 0 : i32
    %c0_i32_0 = arith.constant 0 : i32
    %c0_i32_1 = arith.constant 0 : i32
    return %c0_i32, %c0_i32_0 : i32, i32
  }
  func.func @transform_2(%arg0: i32) -> (i32, i32) {
    %c0_i32 = arith.constant 0 : i32
    %c0_i32_0 = arith.constant 0 : i32
    %c0_i32_1 = arith.constant 0 : i32
    return %c0_i32, %c0_i32_0 : i32, i32
  }
  func.func @transform_3(%arg0: i32) -> (i32, i32) {
    %c0_i32 = arith.constant 0 : i32
    %c0_i32_0 = arith.constant 0 : i32
    %c0_i32_1 = arith.constant 0 : i32
    return %c0_i32, %c0_i32_0 : i32, i32
  }
  func.func @transform_4(%arg0: i32) -> (i32, i32) {
    %c0_i32 = arith.constant 0 : i32
    %c0_i32_0 = arith.constant 0 : i32
    %c0_i32_1 = arith.constant 0 : i32
    return %c0_i32, %c0_i32_0 : i32, i32
  }
  func.func @transform_5(%arg0: i32) -> (i32, i32) {
    %c0_i32 = arith.constant 0 : i32
    %c0_i32_0 = arith.constant 0 : i32
    %c0_i32_1 = arith.constant 0 : i32
    return %c0_i32, %c0_i32_0 : i32, i32
  }
  func.func @transform_6(%arg0: i32) -> (i32, i32) {
    %c0_i32 = arith.constant 0 : i32
    %c0_i32_0 = arith.constant 0 : i32
    return %arg0, %c0_i32 : i32, i32
  }
}

</mosaic_0001>

<llo_original>
// kernel: tpu_custom_call.1
$region0: #{tpu_custom_call.1}
  #allocation0 [shape = 'u32[]', space=smem, size = 0x4, offset = 0x4, fixed_abs, tag = 'smem constant byte address 0x4 - core index']
  #allocation1 [shape = 'u32[72,128]{1,0:T(1,128)}', space=vmem, size = 0x9000, scoped, tag = 'internal scratch']
  %s0 = inlined_call_operand.vmem [shape: f32[8,4], index: 0, kind: input, shape index: {}]
  %s1 = inlined_call_operand.vmem [shape: f32[4,64], index: 1, kind: input, shape index: {}]
  %s2 = inlined_call_operand.vmem [shape: f32[1,64], index: 2, kind: input, shape index: {}]
  %s3 = inlined_call_operand.hbm [shape: f32[64,64], index: 3, kind: input, shape index: {}]
  %s4 = inlined_call_operand.vmem [shape: f32[1,64], index: 4, kind: input, shape index: {}]
  %s5 = inlined_call_operand.hbm [shape: f32[64,128], index: 5, kind: input, shape index: {}]
  %s6 = inlined_call_operand.hbm [shape: f32[8,128], index: 6, kind: output, shape index: {}]
  %s7 = sld [smem:[#allocation0]]
  $region42: #{tpu_custom_call.1} parent=0
    _
  %s9 = ssub.s32 1, %s7
  %s10 = scalar_select 0, %s9, %s7
  $region1: #{tpu_custom_call.1} parent=0
    #allocation2 [shape = 'u8[32768]{0}', space=vmem, size = 0x8000, scoped, tag = 'input window, operand 3, single buffered']
    #allocation3 [shape = 's32[1]{0}', space=sflag, size = 0x4, scoped, tag = 'scoped memory for tpu_custom_call.1']
    #allocation4 [shape = 's32[1]{0}', space=sflag, size = 0x4, scoped, tag = 'scoped memory for tpu_custom_call.1']
    #allocation5 [shape = 'u8[32768]{0}', space=vmem, size = 0x8000, scoped, tag = 'input window, operand 5, single buffered']
    #allocation6 [shape = 's32[1]{0}', space=sflag, size = 0x4, scoped, tag = 'scoped memory for tpu_custom_call.1']
    #allocation7 [shape = 'u8[4096]{0}', space=vmem, size = 0x1000, scoped, tag = 'output window, operand 0, single buffered']
    %11 = vsyncpa [#allocation3], 0
    %12 = vsyncpa [#allocation6], 0
    %13 = vsyncpa [#allocation4], 0
    // Predicated region
    $region2: #{tpu_custom_call.1} parent=1 // pred_check
      _
    $region3: #{tpu_custom_call.1} parent=1 // pred_check_branch
      %15 = sbr.rel (0) target = $region5
    $region4: #{tpu_custom_call.1} parent=1 // pred_region
      _
    $region5: #{tpu_custom_call.1} parent=1 // pred_fallthru
      _
    // Predicated region
    $region6: #{tpu_custom_call.1} parent=1 // pred_check
      _
    $region7: #{tpu_custom_call.1} parent=1 // pred_check_branch
      %17 = sbr.rel (0) target = $region9
    $region8: #{tpu_custom_call.1} parent=1 // pred_region
      _
    $region9: #{tpu_custom_call.1} parent=1 // pred_fallthru
      _
    // Predicated region
    $region10: #{tpu_custom_call.1} parent=1 // pred_check
      _
    $region11: #{tpu_custom_call.1} parent=1 // pred_check_branch
      %19 = sbr.rel (0) target = $region13
    $region12: #{tpu_custom_call.1} parent=1 // pred_region
      _
    $region13: #{tpu_custom_call.1} parent=1 // pred_fallthru
      _
    // Predicated region
    $region14: #{tpu_custom_call.1} parent=1 // pred_check
      _
    $region15: #{tpu_custom_call.1} parent=1 // pred_check_branch
      %21 = sbr.rel (0) target = $region17
    $region16: #{tpu_custom_call.1} parent=1 // pred_region
      %23 = vsyncadd [#allocation3], 0
      %s24 = sshll.u32 %s3, 4
      %s25 = int_to_ptr.hbm [resolvable:$true] %s24
      %s26 = sshll.u32 [#allocation2], 4
      %s27 = int_to_ptr.vmem [resolvable:$true] %s26
      %32 = dma.hbm_to_vmem [thread:$0]  %s25, 1024, %s27, [#allocation3], 128, 128, 8
    $region17: #{tpu_custom_call.1} parent=1 // pred_fallthru
      _
    // Predicated region
    $region18: #{tpu_custom_call.1} parent=1 // pred_check
      _
    $region19: #{tpu_custom_call.1} parent=1 // pred_check_branch
      %34 = sbr.rel (0) target = $region21
    $region20: #{tpu_custom_call.1} parent=1 // pred_region
      _
    $region21: #{tpu_custom_call.1} parent=1 // pred_fallthru
      _
    // Predicated region
    $region22: #{tpu_custom_call.1} parent=1 // pred_check
      _
    $region23: #{tpu_custom_call.1} parent=1 // pred_check_branch
      %36 = sbr.rel (0) target = $region25
    $region24: #{tpu_custom_call.1} parent=1 // pred_region
      %38 = vsyncadd [#allocation6], 0
      %s39 = sshll.u32 %s5, 4
      %s40 = int_to_ptr.hbm [resolvable:$true] %s39
      %s41 = sshll.u32 [#allocation5], 4
      %s42 = int_to_ptr.vmem [resolvable:$true] %s41
      %47 = dma.hbm_to_vmem [thread:$0]  %s40, 1024, %s42, [#allocation6], 128, 128, 8
    $region25: #{tpu_custom_call.1} parent=1 // pred_fallthru
      _
    // Predicated region
    $region26: #{tpu_custom_call.1} parent=1 // pred_check
      _
    $region27: #{tpu_custom_call.1} parent=1 // pred_check_branch
      %49 = sbr.rel (0) target = $region29
    $region28: #{tpu_custom_call.1} parent=1 // pred_region
      %51 = dma.done [#allocation3], 1024
    $region29: #{tpu_custom_call.1} parent=1 // pred_fallthru
      _
    // Predicated region
    $region30: #{tpu_custom_call.1} parent=1 // pred_check
      _
    $region31: #{tpu_custom_call.1} parent=1 // pred_check_branch
      %53 = sbr.rel (0) target = $region33
    $region32: #{tpu_custom_call.1} parent=1 // pred_region
      %55 = dma.done [#allocation6], 1024
    $region33: #{tpu_custom_call.1} parent=1 // pred_fallthru
      _
    %v56 = vld [vmem:[%s0] sm:$0xff]
    %v57 = vld [vmem:[%s1] sm:$0xf]
    %59 = vset.pattern.permute.xlu0 0
    %60 = vperm.xlu0 %59, %v56
    %v61 = vpop.permute.xlu0 %60
    %v63 = vperm.slane %v57, 0
    %v64 = vmul.f32 %v61, %v63
    %v65 = vld [vmem:[%s2] sm:$0x1]
    %v67 = vperm.slane %v65, 0
    %v69 = vadd.f32 %v64, %v67
    %70 = vset.pattern.permute.xlu0 1
    %71 = vperm.xlu0 %70, %v56
    %v72 = vpop.permute.xlu0 %71
    %v74 = vperm.slane %v57, 1
    %v75 = vmul.f32 %v72, %v74
    %v76 = vadd.f32 %v69, %v75
    %77 = vset.pattern.permute.xlu0 2
    %78 = vperm.xlu0 %77, %v56
    %v79 = vpop.permute.xlu0 %78
    %v81 = vperm.slane %v57, 2
    %v82 = vmul.f32 %v79, %v81
    %v83 = vadd.f32 %v76, %v82
    %84 = vset.pattern.permute.xlu0 3
    %85 = vperm.xlu0 %84, %v56
    %v86 = vpop.permute.xlu0 %85
    %v88 = vperm.slane %v57, 3
    %v89 = vmul.f32 %v86, %v88
    %v90 = vadd.f32 %v83, %v89
    %v91 = vmax.f32 %v90, 0.0
    %v92 = vld [vmem:[#allocation2] sm:$0xff]
    %v93 = vld [vmem:[#allocation2 + $0x8] sm:$0xff]
    %v94 = vld [vmem:[#allocation2 + $0x10] sm:$0xff]
    %v95 = vld [vmem:[#allocation2 + $0x18] sm:$0xff]
    %v96 = vld [vmem:[#allocation2 + $0x20] sm:$0xff]
    %v97 = vld [vmem:[#allocation2 + $0x28] sm:$0xff]
    %v98 = vld [vmem:[#allocation2 + $0x30] sm:$0xff]
    %v99 = vld [vmem:[#allocation2 + $0x38] sm:$0xff]
    %v100 = vld [vmem:[%s4] sm:$0x1]
    %v102 = vperm.slane %v100, 0
    %vm104 = vcmask 523264
    %v106 = vsel %vm104, %v91, 0
    %108 = vmatpush.msra.mxu0 0.0
    %109 = vmatpush.msra.mxu0 0.0
    %110 = vmatpush.msra.mxu0 0.0
    %111 = vmatpush.msra.mxu0 0.0
    %112 = vmatpush.msra.mxu0 0.0
    %113 = vmatpush.msra.mxu0 0.0
    %114 = vmatpush.msra.mxu0 0.0
    %115 = vmatpush.msra.mxu0 0.0
    %116 = vmatpush.msra.mxu0 %v99
    %117 = vmatpush.msra.mxu0 %v98
    %118 = vmatpush.msra.mxu0 %v97
    %119 = vmatpush.msra.mxu0 %v96
    %120 = vmatpush.msra.mxu0 %v95
    %121 = vmatpush.msra.mxu0 %v94
    %122 = vmatpush.msra.mxu0 %v93
    %123 = vmatpush.msra.mxu0 %v92
    %124 = vmatmul.f32.gmra.mxu0 %v106
    %v125 = vpop.f32.mrf.mxu0
    %v126 = vadd.f32 %v102, %v125
    %127 = vdwg.mxu0
    %v128 = vmax.f32 %v126, 0.0
    %v129 = vld [vmem:[#allocation5] sm:$0xff]
    %v130 = vld [vmem:[#allocation5 + $0x8] sm:$0xff]
    %v131 = vld [vmem:[#allocation5 + $0x10] sm:$0xff]
    %v132 = vld [vmem:[#allocation5 + $0x18] sm:$0xff]
    %v133 = vld [vmem:[#allocation5 + $0x20] sm:$0xff]
    %v134 = vld [vmem:[#allocation5 + $0x28] sm:$0xff]
    %v135 = vld [vmem:[#allocation5 + $0x30] sm:$0xff]
    %v136 = vld [vmem:[#allocation5 + $0x38] sm:$0xff]
    %v138 = vsel %vm104, %v128, 0
    %140 = vmatpush.msra.mxu0 0.0
    %141 = vmatpush.msra.mxu0 0.0
    %142 = vmatpush.msra.mxu0 0.0
    %143 = vmatpush.msra.mxu0 0.0
    %144 = vmatpush.msra.mxu0 0.0
    %145 = vmatpush.msra.mxu0 0.0
    %146 = vmatpush.msra.mxu0 0.0
    %147 = vmatpush.msra.mxu0 0.0
    %148 = vmatpush.msra.mxu0 %v136
    %149 = vmatpush.msra.mxu0 %v135
    %150 = vmatpush.msra.mxu0 %v134
    %151 = vmatpush.msra.mxu0 %v133
    %152 = vmatpush.msra.mxu0 %v132
    %153 = vmatpush.msra.mxu0 %v131
    %154 = vmatpush.msra.mxu0 %v130
    %155 = vmatpush.msra.mxu0 %v129
    %156 = vmatmul.f32.gmra.mxu0 %v138
    %v157 = vpop.f32.mrf.mxu0
    %v158 = vadd.f32 0.0, %v157
    %159 = vdwg.mxu0
    %160 = vst [vmem:[#allocation7] sm:$0xff] %v158
    // Predicated region
    $region34: #{tpu_custom_call.1} parent=1 // pred_check
      _
    $region35: #{tpu_custom_call.1} parent=1 // pred_check_branch
      %162 = sbr.rel (0) target = $region37
    $region36: #{tpu_custom_call.1} parent=1 // pred_region
      %164 = vsyncadd [#allocation4], 0
      %s166 = sshll.u32 [#allocation7], 4
      %s167 = int_to_ptr.vmem [resolvable:$true] %s166
      %s168 = sshll.u32 %s6, 4
      %s169 = int_to_ptr.hbm [resolvable:$true] %s168
      %171 = dma.vmem_to_hbm [thread:$0]  %s167, 128, %s169, [#allocation4]
    $region37: #{tpu_custom_call.1} parent=1 // pred_fallthru
      _
    // Predicated region
    $region38: #{tpu_custom_call.1} parent=1 // pred_check
      _
    $region39: #{tpu_custom_call.1} parent=1 // pred_check_branch
      %173 = sbr.rel (0) target = $region41
    $region40: #{tpu_custom_call.1} parent=1 // pred_region
      %175 = dma.done [#allocation4], 128
    $region41: #{tpu_custom_call.1} parent=1 // pred_fallthru
      _
    %176 = vsyncpa [#allocation3], 1
    %177 = vsyncpa [#allocation6], 1
    %178 = vsyncpa [#allocation4], 1

</llo_original>
